<compile_context>
chip_gen: v6e
topology: v6e:2x2x1
jax: 0.10.0
libtpu: 0.0.40
codegen_flags: <defaults>
</compile_context>

<pallas_src>
import jax
import jax.numpy as jnp
from jax.experimental import pallas as pl
from jax.experimental.pallas import tpu as pltpu


def _round_up(n, m):
    return ((n + m - 1) // m) * m


def _mlp_kernel(x_ref, w1_ref, b1_ref, w2_ref, b2_ref, w3_ref, b3_ref, o_ref):
    tb = x_ref.shape[0]

    # fc1: (bf16 x bf16) -> f32 on the MXU; bias + ReLU in f32 on the VPU.
    h1 = jnp.dot(x_ref[...], w1_ref[...], preferred_element_type=jnp.float32)
    h1 = jnp.maximum(h1 + b1_ref[...], 0.0)

    # fc2: cast activations back to the weight dtype (bf16) only for the MXU
    # feed; accumulate in f32, bias + ReLU in f32.
    h2 = jnp.dot(h1.astype(w2_ref.dtype), w2_ref[...],
                 preferred_element_type=jnp.float32)
    h2 = jnp.maximum(h2 + b2_ref[...], 0.0)

    # fc3 (N=1): lane reduction on VPU/XLU instead of a 1-lane MXU matmul.
    # w3_ref is the transposed weight row [1, 64]; result y is (TB,).
    y = jnp.sum(h2 * w3_ref[...], axis=-1)

    # Lane-major, lane-dense store: [1, TB] block (unmasked vst).
    o_ref[...] = (jnp.reshape(y, (1, tb)) + b3_ref[...]).astype(o_ref.dtype)


def wine_quality_net(x, params, *, block_b=1024, use_bf16=True):
    """Forward pass of WineQualityNet.

    x: [B, input_dim] float32
    params: dict with w1 [D,128], b1 [1,128], w2 [128,64], b2 [1,64],
            w3 [64,1], b3 [1,1]  (weights stored as [in, out])
    returns: [B, 1] float32
    """
    w1, b1 = params["w1"], params["b1"]
    w2, b2 = params["w2"], params["b2"]
    w3, b3 = params["w3"], params["b3"]
    B, D = x.shape

    # Batch tile: multiple of 16 (clean sublane packing for bf16), capped so a
    # tile + its double buffer stays far below scoped VMEM on every chip.
    tb = min(int(block_b), _round_up(B, 16))
    tb = _round_up(tb, 16)
    b_pad = _round_up(B, tb)
    if b_pad != B:
        x = jnp.pad(x, ((0, b_pad - B), (0, 0)))

    if use_bf16:
        # Only the MXU-fed arrays go to bf16; biases / w3 / all elementwise
        # math stay f32 (v5e VPU/EUP have no bf16).
        x = x.astype(jnp.bfloat16)
        w1 = w1.astype(jnp.bfloat16)
        w2 = w2.astype(jnp.bfloat16)

    w3_row = jnp.reshape(w3, (1, w3.shape[0])).astype(jnp.float32)  # [1, 64]
    b1 = b1.astype(jnp.float32)
    b2 = b2.astype(jnp.float32)
    b3 = b3.astype(jnp.float32)

    nb = b_pad // tb

    resident = lambda a: pl.BlockSpec(a.shape, lambda i: (0,) * a.ndim)

    out = pl.pallas_call(
        _mlp_kernel,
        out_shape=jax.ShapeDtypeStruct((1, b_pad), jnp.float32),
        grid=(nb,),
        in_specs=[
            pl.BlockSpec((tb, D), lambda i: (i, 0)),   # x streams by batch tile
            resident(w1), resident(b1),                # weights stay VMEM-resident
            resident(w2), resident(b2),
            resident(w3_row), resident(b3),
        ],
        out_specs=pl.BlockSpec((1, tb), lambda i: (0, i)),  # lane-major output
        compiler_params=pltpu.CompilerParams(
            dimension_semantics=("parallel",)),
    )(x, w1, b1, w2, b2, w3_row, b3)

    return out[0, :B].reshape(B, 1)


def init_params(key, input_dim):
    """Deterministic parameter init (PyTorch-style uniform bounds)."""
    ks = jax.random.split(key, 6)

    def linear(kw, kb, fan_in, fan_out):
        bound = 1.0 / jnp.sqrt(float(fan_in))
        w = jax.random.uniform(kw, (fan_in, fan_out), jnp.float32, -bound, bound)
        b = jax.random.uniform(kb, (1, fan_out), jnp.float32, -bound, bound)
        return w, b

    w1, b1 = linear(ks[0], ks[1], input_dim, 128)
    w2, b2 = linear(ks[2], ks[3], 128, 64)
    w3, b3 = linear(ks[4], ks[5], 64, 1)
    return {"w1": w1, "b1": b1, "w2": w2, "b2": b2, "w3": w3, "b3": b3}


def _emulate_bf16(a):
    return a.astype(jnp.bfloat16).astype(jnp.float32)


def _reference(x, p, use_bf16=True):
    """Pure-JAX reference with the same bf16 MXU-feed quantization."""
    if use_bf16:
        x = _emulate_bf16(x)
        w1 = _emulate_bf16(p["w1"])
        w2 = _emulate_bf16(p["w2"])
    else:
        w1, w2 = p["w1"], p["w2"]
    h1 = jnp.maximum(x @ w1 + p["b1"], 0.0)
    if use_bf16:
        h1 = _emulate_bf16(h1)
    h2 = jnp.maximum(h1 @ w2 + p["b2"], 0.0)
    return h2 @ p["w3"] + p["b3"]


if __name__ == "__main__":
    key = jax.random.PRNGKey(0)
    k_x, k_p, k_x2 = jax.random.split(key, 3)

    input_dim = 11  # wine-quality feature count
    params = init_params(k_p, input_dim)

    # Small smoke test (single grid step, block == full array).
    batch = 8
    x = jax.random.normal(k_x, (batch, input_dim), jnp.float32)
    out = jax.block_until_ready(wine_quality_net(x, params))
    ref = _reference(x, params)
    assert out.shape == (batch, 1)
    assert jnp.allclose(out, ref, atol=1e-4, rtol=1e-4), \
        float(jnp.max(jnp.abs(out - ref)))

    # Multi-tile test: exercises batch tiling, resident weights, and the
    # explicit remainder padding (2000 rows -> 4 tiles of 512, last padded).
    batch2 = 2000
    x2 = jax.random.normal(k_x2, (batch2, input_dim), jnp.float32)
    out2 = jax.block_until_ready(wine_quality_net(x2, params, block_b=512))
    ref2 = _reference(x2, params)
    assert out2.shape == (batch2, 1)
    assert jnp.allclose(out2, ref2, atol=1e-4, rtol=1e-4), \
        float(jnp.max(jnp.abs(out2 - ref2)))

    print("KERNEL_OK")
</pallas_src>

<mosaic_0001>
module attributes {stable_mosaic.version = 11 : i64} {
  func.func @_mlp_kernel(%arg0: i32, %arg1: memref<16x11xbf16, #tpu.memory_space<vmem>>, %arg2: memref<11x128xbf16, #tpu.memory_space<vmem>>, %arg3: memref<1x128xf32, #tpu.memory_space<vmem>>, %arg4: memref<128x64xbf16, #tpu.memory_space<vmem>>, %arg5: memref<1x64xf32, #tpu.memory_space<vmem>>, %arg6: memref<1x64xf32, #tpu.memory_space<vmem>>, %arg7: memref<1x1xf32, #tpu.memory_space<vmem>>, %arg8: memref<1x16xf32, #tpu.memory_space<vmem>>) attributes {dimension_semantics = [#tpu.dimension_semantics<parallel>], iteration_bounds = array<i64: 1>, scalar_prefetch = 0 : i64, scratch_operands = 0 : i64, tpu.core_type = #tpu.core_type<tc>, window_params = [{transform_indices = @transform_0, window_bounds = array<i64: 16, 11>}, {pipeline_mode = #tpu.pipeline_mode<synchronous>, transform_indices = @transform_1, window_bounds = array<i64: 11, 128>}, {pipeline_mode = #tpu.pipeline_mode<synchronous>, transform_indices = @transform_2, window_bounds = array<i64: 1, 128>}, {pipeline_mode = #tpu.pipeline_mode<synchronous>, transform_indices = @transform_3, window_bounds = array<i64: 128, 64>}, {pipeline_mode = #tpu.pipeline_mode<synchronous>, transform_indices = @transform_4, window_bounds = array<i64: 1, 64>}, {pipeline_mode = #tpu.pipeline_mode<synchronous>, transform_indices = @transform_5, window_bounds = array<i64: 1, 64>}, {pipeline_mode = #tpu.pipeline_mode<synchronous>, transform_indices = @transform_6, window_bounds = array<i64: 1, 1>}, {transform_indices = @transform_7, window_bounds = array<i64: 1, 16>}]} {
    %c0 = arith.constant 0 : index
    %c0_0 = arith.constant 0 : index
    %0 = vector.load %arg1[%c0, %c0_0] : memref<16x11xbf16, #tpu.memory_space<vmem>>, vector<16x11xbf16>
    %c0_1 = arith.constant 0 : index
    %c0_2 = arith.constant 0 : index
    %1 = vector.load %arg2[%c0_1, %c0_2] : memref<11x128xbf16, #tpu.memory_space<vmem>>, vector<11x128xbf16>
    %cst = arith.constant dense<0.000000e+00> : vector<16x128xf32>
    %2 = tpu.matmul %0, %1, %cst {dimension_numbers = #tpu.dot_dimension_numbers<[1], [0], [0], [1], [0, 0, 1, 1], [], []>} : vector<16x11xbf16>, vector<11x128xbf16>, vector<16x128xf32> -> vector<16x128xf32>
    %c0_3 = arith.constant 0 : index
    %c0_4 = arith.constant 0 : index
    %3 = vector.load %arg3[%c0_3, %c0_4] : memref<1x128xf32, #tpu.memory_space<vmem>>, vector<1x128xf32>
    %4 = vector.broadcast %3 : vector<1x128xf32> to vector<16x128xf32>
    %5 = arith.addf %2, %4 : vector<16x128xf32>
    %cst_5 = arith.constant 0.000000e+00 : f32
    %6 = vector.broadcast %cst_5 : f32 to vector<16x128xf32>
    %7 = arith.maximumf %5, %6 : vector<16x128xf32>
    %8 = arith.truncf %7 : vector<16x128xf32> to vector<16x128xbf16>
    %c0_6 = arith.constant 0 : index
    %c0_7 = arith.constant 0 : index
    %9 = vector.load %arg4[%c0_6, %c0_7] : memref<128x64xbf16, #tpu.memory_space<vmem>>, vector<128x64xbf16>
    %cst_8 = arith.constant dense<0.000000e+00> : vector<16x64xf32>
    %10 = tpu.matmul %8, %9, %cst_8 {dimension_numbers = #tpu.dot_dimension_numbers<[1], [0], [0], [1], [0, 0, 1, 1], [], []>} : vector<16x128xbf16>, vector<128x64xbf16>, vector<16x64xf32> -> vector<16x64xf32>
    %c0_9 = arith.constant 0 : index
    %c0_10 = arith.constant 0 : index
    %11 = vector.load %arg5[%c0_9, %c0_10] : memref<1x64xf32, #tpu.memory_space<vmem>>, vector<1x64xf32>
    %12 = vector.broadcast %11 : vector<1x64xf32> to vector<16x64xf32>
    %13 = arith.addf %10, %12 : vector<16x64xf32>
    %cst_11 = arith.constant 0.000000e+00 : f32
    %14 = vector.broadcast %cst_11 : f32 to vector<16x64xf32>
    %15 = arith.maximumf %13, %14 : vector<16x64xf32>
    %c0_12 = arith.constant 0 : index
    %c0_13 = arith.constant 0 : index
    %16 = vector.load %arg6[%c0_12, %c0_13] : memref<1x64xf32, #tpu.memory_space<vmem>>, vector<1x64xf32>
    %17 = vector.broadcast %16 : vector<1x64xf32> to vector<16x64xf32>
    %18 = arith.mulf %15, %17 : vector<16x64xf32>
    %cst_14 = arith.constant dense<0.000000e+00> : vector<16xf32>
    %19 = vector.multi_reduction <add>, %18, %cst_14 [1] : vector<16x64xf32> to vector<16xf32>
    %20 = vector.shape_cast %19 : vector<16xf32> to vector<1x16xf32>
    %c0_15 = arith.constant 0 : index
    %c0_16 = arith.constant 0 : index
    %21 = vector.load %arg7[%c0_15, %c0_16] : memref<1x1xf32, #tpu.memory_space<vmem>>, vector<1x1xf32>
    %22 = vector.broadcast %21 : vector<1x1xf32> to vector<1x16xf32>
    %23 = arith.addf %20, %22 : vector<1x16xf32>
    %c0_17 = arith.constant 0 : index
    %c0_18 = arith.constant 0 : index
    %24 = vector.load %arg8[%c0_17, %c0_18] : memref<1x16xf32, #tpu.memory_space<vmem>>, vector<1x16xf32>
    tpu.vector_store %arg8[%c0_17, %c0_18], %23 {strides = array<i32>} : memref<1x16xf32, #tpu.memory_space<vmem>>, vector<1x16xf32>,
    return
  }
  func.func @transform_0(%arg0: i32) -> (i32, i32) {
    %c0_i32 = arith.constant 0 : i32
    %c0_i32_0 = arith.constant 0 : i32
    return %arg0, %c0_i32 : i32, i32
  }
  func.func @transform_1(%arg0: i32) -> (i32, i32) {
    %c0_i32 = arith.constant 0 : i32
    %c0_i32_0 = arith.constant 0 : i32
    %c0_i32_1 = arith.constant 0 : i32
    return %c0_i32, %c0_i32_0 : i32, i32
  }
  func.func @transform_2(%arg0: i32) -> (i32, i32) {
    %c0_i32 = arith.constant 0 : i32
    %c0_i32_0 = arith.constant 0 : i32
    %c0_i32_1 = arith.constant 0 : i32
    return %c0_i32, %c0_i32_0 : i32, i32
  }
  func.func @transform_3(%arg0: i32) -> (i32, i32) {
    %c0_i32 = arith.constant 0 : i32
    %c0_i32_0 = arith.constant 0 : i32
    %c0_i32_1 = arith.constant 0 : i32
    return %c0_i32, %c0_i32_0 : i32, i32
  }
  func.func @transform_4(%arg0: i32) -> (i32, i32) {
    %c0_i32 = arith.constant 0 : i32
    %c0_i32_0 = arith.constant 0 : i32
    %c0_i32_1 = arith.constant 0 : i32
    return %c0_i32, %c0_i32_0 : i32, i32
  }
  func.func @transform_5(%arg0: i32) -> (i32, i32) {
    %c0_i32 = arith.constant 0 : i32
    %c0_i32_0 = arith.constant 0 : i32
    %c0_i32_1 = arith.constant 0 : i32
    return %c0_i32, %c0_i32_0 : i32, i32
  }
  func.func @transform_6(%arg0: i32) -> (i32, i32) {
    %c0_i32 = arith.constant 0 : i32
    %c0_i32_0 = arith.constant 0 : i32
    %c0_i32_1 = arith.constant 0 : i32
    return %c0_i32, %c0_i32_0 : i32, i32
  }
  func.func @transform_7(%arg0: i32) -> (i32, i32) {
    %c0_i32 = arith.constant 0 : i32
    %c0_i32_0 = arith.constant 0 : i32
    return %c0_i32, %arg0 : i32, i32
  }
}

</mosaic_0001>

<llo_original>
// kernel: tpu_custom_call.1
$region0: #{tpu_custom_call.1}
  #allocation0 [shape = 'u32[]', space=smem, size = 0x4, offset = 0x4, fixed_abs, tag = 'smem constant byte address 0x4 - core index']
  #allocation1 [shape = 'u32[144,128]{1,0:T(1,128)}', space=vmem, size = 0x12000, scoped, tag = 'internal scratch']
  #allocation2 [shape = 'f32[1,1]{1,0:T(1,128)S(1)}', space=vmem, size = 0x200, scoped, tag = 'scoped memory for tpu_custom_call.1']
  %s0 = inlined_call_operand.vmem [shape: bf16[16,11], index: 0, kind: input, shape index: {}]
  %s1 = inlined_call_operand.vmem [shape: bf16[11,128], index: 1, kind: input, shape index: {}]
  %s2 = inlined_call_operand.vmem [shape: f32[1,128], index: 2, kind: input, shape index: {}]
  %s3 = inlined_call_operand.vmem [shape: bf16[128,64], index: 3, kind: input, shape index: {}]
  %s4 = inlined_call_operand.vmem [shape: f32[1,64], index: 4, kind: input, shape index: {}]
  %s5 = inlined_call_operand.vmem [shape: f32[1,64], index: 5, kind: input, shape index: {}]
  %s6 = inlined_call_operand.<no memory space> [shape: f32[1,1], index: 6, kind: input, shape index: {}]
  %s7 = inlined_call_operand.hbm [shape: f32[1,16], index: 7, kind: output, shape index: {}]
  %s8 = sld [smem:[#allocation0]]
  $region38: #{tpu_custom_call.1} parent=0
    _
  %s10 = ssub.s32 1, %s8
  %s11 = scalar_select 0, %s10, %s8
  %v12 = vstv %s6
  %13 = vst [vmem:[#allocation2] sm:$0x1] %v12
  $region1: #{tpu_custom_call.1} parent=0
    #allocation3 [shape = 'u8[512]{0}', space=vmem, size = 0x400, scoped, tag = 'output window, operand 0, single buffered']
    #allocation4 [shape = 's32[1]{0}', space=sflag, size = 0x4, scoped, tag = 'scoped memory for tpu_custom_call.1']
    %14 = vsyncpa [#allocation4], 0
    // Predicated region
    $region2: #{tpu_custom_call.1} parent=1 // pred_check
      _
    $region3: #{tpu_custom_call.1} parent=1 // pred_check_branch
      %16 = sbr.rel (0) target = $region5
    $region4: #{tpu_custom_call.1} parent=1 // pred_region
      _
    $region5: #{tpu_custom_call.1} parent=1 // pred_fallthru
      _
    // Predicated region
    $region6: #{tpu_custom_call.1} parent=1 // pred_check
      _
    $region7: #{tpu_custom_call.1} parent=1 // pred_check_branch
      %18 = sbr.rel (0) target = $region9
    $region8: #{tpu_custom_call.1} parent=1 // pred_region
      _
    $region9: #{tpu_custom_call.1} parent=1 // pred_fallthru
      _
    // Predicated region
    $region10: #{tpu_custom_call.1} parent=1 // pred_check
      _
    $region11: #{tpu_custom_call.1} parent=1 // pred_check_branch
      %20 = sbr.rel (0) target = $region13
    $region12: #{tpu_custom_call.1} parent=1 // pred_region
      _
    $region13: #{tpu_custom_call.1} parent=1 // pred_fallthru
      _
    // Predicated region
    $region14: #{tpu_custom_call.1} parent=1 // pred_check
      _
    $region15: #{tpu_custom_call.1} parent=1 // pred_check_branch
      %22 = sbr.rel (0) target = $region17
    $region16: #{tpu_custom_call.1} parent=1 // pred_region
      _
    $region17: #{tpu_custom_call.1} parent=1 // pred_fallthru
      _
    // Predicated region
    $region18: #{tpu_custom_call.1} parent=1 // pred_check
      _
    $region19: #{tpu_custom_call.1} parent=1 // pred_check_branch
      %24 = sbr.rel (0) target = $region21
    $region20: #{tpu_custom_call.1} parent=1 // pred_region
      _
    $region21: #{tpu_custom_call.1} parent=1 // pred_fallthru
      _
    // Predicated region
    $region22: #{tpu_custom_call.1} parent=1 // pred_check
      _
    $region23: #{tpu_custom_call.1} parent=1 // pred_check_branch
      %26 = sbr.rel (0) target = $region25
    $region24: #{tpu_custom_call.1} parent=1 // pred_region
      _
    $region25: #{tpu_custom_call.1} parent=1 // pred_fallthru
      _
    // Predicated region
    $region26: #{tpu_custom_call.1} parent=1 // pred_check
      _
    $region27: #{tpu_custom_call.1} parent=1 // pred_check_branch
      %28 = sbr.rel (0) target = $region29
    $region28: #{tpu_custom_call.1} parent=1 // pred_region
      _
    $region29: #{tpu_custom_call.1} parent=1 // pred_fallthru
      _
    %v30 = vld [vmem:[%s0] sm:$0xf]
    %v31 = vld [vmem:[%s0 + $0x4] sm:$0xf]
    %v32 = vld [vmem:[%s1] sm:$0xf]
    %v33 = vld [vmem:[%s1 + $0x4] sm:$0x3]
    %v34 = vld [vmem:[%s2] sm:$0x1]
    %v36 = vlaneseq
    %v37 = vshrl.u32 %v36, 7
    %v38 = vsub.s32 0, %v37
    %v39 = vrot.slane %v34, %v38
    %v43 = vunpack.c.l.b16 %v30
    %v44 = vunpack.c.l.b16 %v31
    %v45 = vpack.c.b16 %v44, %v43
    %v48 = vunpack.c.l.b16 %v32
    %v49 = vunpack.c.l.b16 %v33
    %v50 = vpack.c.b16 %v49, %v48
    %vm51 = vcmask 89088
    %v53 = vsel %vm51, %v45, 0
    %vm55 = vcmask 1044480
    %vm56 = vcmask 1045504
    %v57 = vsel %vm55, 4294967295, 65535
    %v58 = vsel %vm56, %v57, 0
    %v60 = vand.u32 %v50, %v58
    %62 = vmatprep.subr.bf16.mxu0 0
    %63 = vmatpush1.bf16.msra.mxu0 0
    %64 = vmatprep.subr.bf16.mxu0 0
    %65 = vmatpush1.bf16.msra.mxu0 0
    %66 = vmatprep.subr.bf16.mxu0 0
    %67 = vmatpush1.bf16.msra.mxu0 0
    %68 = vmatprep.subr.bf16.mxu0 0
    %69 = vmatpush1.bf16.msra.mxu0 0
    %70 = vmatprep.subr.bf16.mxu0 0
    %71 = vmatpush1.bf16.msra.mxu0 0
    %72 = vmatprep.subr.bf16.mxu0 0
    %73 = vmatpush1.bf16.msra.mxu0 0
    %74 = vmatprep.subr.bf16.mxu0 0
    %75 = vmatpush1.bf16.msra.mxu0 0
    %76 = vmatprep.subr.bf16.mxu0 0
    %77 = vmatpush1.bf16.msra.mxu0 %v60
    %78 = vmatprep.subr.bf16.mxu0 0
    %79 = vmatpush2.bf16.msra.mxu0 0
    %80 = vmatprep.subr.bf16.mxu0 0
    %81 = vmatpush2.bf16.msra.mxu0 0
    %82 = vmatprep.subr.bf16.mxu0 0
    %83 = vmatpush2.bf16.msra.mxu0 0
    %84 = vmatprep.subr.bf16.mxu0 0
    %85 = vmatpush2.bf16.msra.mxu0 0
    %86 = vmatprep.subr.bf16.mxu0 0
    %87 = vmatpush2.bf16.msra.mxu0 0
    %88 = vmatprep.subr.bf16.mxu0 0
    %89 = vmatpush2.bf16.msra.mxu0 0
    %90 = vmatprep.subr.bf16.mxu0 0
    %91 = vmatpush2.bf16.msra.mxu0 0
    %92 = vmatprep.subr.bf16.mxu0 0
    %93 = vmatpush2.bf16.msra.mxu0 0
    %94 = vmatprep.mubr.bf16.mxu0 0
    %95 = vmatmul.mubr.bf16.gmra.mxu0 %v53
    %v96 = vpop.f32.mrf.mxu0
    %v97 = vadd.f32 %v39, %v96
    %v98 = vpop.f32.mrf.mxu0
    %v99 = vpop.f32.mrf.mxu0
    %v100 = vadd.f32 %v39, %v99
    %v101 = vpop.f32.mrf.mxu0
    %102 = vdwg.mxu0
    %v103 = vmax.f32 %v97, 0.0
    %v104 = vmax.f32 %v100, 0.0
    %v105 = vpack.c.bf16 %v104, %v103
    %v106 = vld [vmem:[%s3] sm:$0xf]
    %v107 = vld [vmem:[%s3 + $0x4] sm:$0xf]
    %v108 = vld [vmem:[%s3 + $0x8] sm:$0xf]
    %v109 = vld [vmem:[%s3 + $0xc] sm:$0xf]
    %v110 = vld [vmem:[%s3 + $0x10] sm:$0xf]
    %v111 = vld [vmem:[%s3 + $0x14] sm:$0xf]
    %v112 = vld [vmem:[%s3 + $0x18] sm:$0xf]
    %v113 = vld [vmem:[%s3 + $0x1c] sm:$0xf]
    %v114 = vld [vmem:[%s3 + $0x20] sm:$0xf]
    %v115 = vld [vmem:[%s3 + $0x24] sm:$0xf]
    %v116 = vld [vmem:[%s3 + $0x28] sm:$0xf]
    %v117 = vld [vmem:[%s3 + $0x2c] sm:$0xf]
    %v118 = vld [vmem:[%s3 + $0x30] sm:$0xf]
    %v119 = vld [vmem:[%s3 + $0x34] sm:$0xf]
    %v120 = vld [vmem:[%s3 + $0x38] sm:$0xf]
    %v121 = vld [vmem:[%s3 + $0x3c] sm:$0xf]
    %v122 = vld [vmem:[%s4] sm:$0x1]
    %v124 = vlaneseq
    %v125 = vshrl.u32 %v124, 7
    %v126 = vsub.s32 0, %v125
    %v127 = vrot.slane %v122, %v126
    %v145 = vunpack.c.l.b16 %v106
    %v146 = vunpack.c.l.b16 %v107
    %v147 = vunpack.c.l.b16 %v108
    %v148 = vunpack.c.l.b16 %v109
    %v149 = vunpack.c.l.b16 %v110
    %v150 = vunpack.c.l.b16 %v111
    %v151 = vunpack.c.l.b16 %v112
    %v152 = vunpack.c.l.b16 %v113
    %v153 = vunpack.c.l.b16 %v114
    %v154 = vunpack.c.l.b16 %v115
    %v155 = vunpack.c.l.b16 %v116
    %v156 = vunpack.c.l.b16 %v117
    %v157 = vunpack.c.l.b16 %v118
    %v158 = vunpack.c.l.b16 %v119
    %v159 = vunpack.c.l.b16 %v120
    %v160 = vunpack.c.l.b16 %v121
    %v161 = vpack.c.b16 %v146, %v145
    %v162 = vpack.c.b16 %v148, %v147
    %v163 = vpack.c.b16 %v150, %v149
    %v164 = vpack.c.b16 %v152, %v151
    %v165 = vpack.c.b16 %v154, %v153
    %v166 = vpack.c.b16 %v156, %v155
    %v167 = vpack.c.b16 %v158, %v157
    %v168 = vpack.c.b16 %v160, %v159
    %177 = vmatprep.subr.bf16.mxu0 0
    %178 = vmatpush1.bf16.msra.mxu0 %v168
    %179 = vmatprep.subr.bf16.mxu0 0
    %180 = vmatpush1.bf16.msra.mxu0 %v167
    %181 = vmatprep.subr.bf16.mxu0 0
    %182 = vmatpush1.bf16.msra.mxu0 %v166
    %183 = vmatprep.subr.bf16.mxu0 0
    %184 = vmatpush1.bf16.msra.mxu0 %v165
    %185 = vmatprep.subr.bf16.mxu0 0
    %186 = vmatpush1.bf16.msra.mxu0 %v164
    %187 = vmatprep.subr.bf16.mxu0 0
    %188 = vmatpush1.bf16.msra.mxu0 %v163
    %189 = vmatprep.subr.bf16.mxu0 0
    %190 = vmatpush1.bf16.msra.mxu0 %v162
    %191 = vmatprep.subr.bf16.mxu0 0
    %192 = vmatpush1.bf16.msra.mxu0 %v161
    %193 = vmatprep.subr.bf16.mxu0 0
    %194 = vmatpush2.bf16.msra.mxu0 0
    %195 = vmatprep.subr.bf16.mxu0 0
    %196 = vmatpush2.bf16.msra.mxu0 0
    %197 = vmatprep.subr.bf16.mxu0 0
    %198 = vmatpush2.bf16.msra.mxu0 0
    %199 = vmatprep.subr.bf16.mxu0 0
    %200 = vmatpush2.bf16.msra.mxu0 0
    %201 = vmatprep.subr.bf16.mxu0 0
    %202 = vmatpush2.bf16.msra.mxu0 0
    %203 = vmatprep.subr.bf16.mxu0 0
    %204 = vmatpush2.bf16.msra.mxu0 0
    %205 = vmatprep.subr.bf16.mxu0 0
    %206 = vmatpush2.bf16.msra.mxu0 0
    %207 = vmatprep.subr.bf16.mxu0 0
    %208 = vmatpush2.bf16.msra.mxu0 0
    %209 = vmatprep.mubr.bf16.mxu0 0
    %210 = vmatmul.mubr.bf16.gmra.mxu0 %v105
    %v211 = vpop.f32.mrf.mxu0
    %v212 = vadd.f32 %v127, %v211
    %v213 = vpop.f32.mrf.mxu0
    %v214 = vpop.f32.mrf.mxu0
    %v215 = vadd.f32 %v127, %v214
    %v216 = vpop.f32.mrf.mxu0
    %217 = vdwg.mxu0
    %v218 = vmax.f32 %v212, 0.0
    %v219 = vmax.f32 %v215, 0.0
    %v220 = vld [vmem:[%s5] sm:$0x1]
    %v222 = vlaneseq
    %v223 = vshrl.u32 %v222, 7
    %v224 = vsub.s32 0, %v223
    %v225 = vrot.slane %v220, %v224
    %v227 = vmul.f32 %v218, %v225
    %v228 = vmul.f32 %v219, %v225
    %vm229 = vcmask 523264
    %v230 = vsel %vm229, %v227, 0.0
    %231 = vadd.xlane.f32.xlu0 %v230
    %v232 = vpop.xlane.xlu0 %231
    %v233 = vsel %vm229, %v228, 0.0
    %234 = vadd.xlane.f32.xlu0 %v233
    %v235 = vpop.xlane.xlu0 %234
    %v236 = vld [vmem:[#allocation2] sm:$0x1]
    %238 = vset.pattern.permute.xlu0 0
    %239 = vperm.xlu0 %238, %v236
    %v240 = vpop.permute.xlu0 %239
    %v242 = vlaneseq
    %v243 = vshrl.u32 %v242, 7
    %v244 = vsub.s32 0, %v243
    %v245 = vrot.slane %v240, %v244
    %v246 = vadd.f32 %v232, %v245
    %v247 = vadd.f32 %v235, %v245
    %v250 = vlaneseq
    %v251 = vand.u32 %v250, 127
    %v252 = vlaneseq
    %v253 = vshrl.u32 %v252, 7
    %v254 = vsub.s32 %v251, %v253
    %v255 = vrot.slane %v246, %v254
    %v256 = vadd.s32 %v251, 4294967288
    %v257 = vlaneseq
    %v258 = vshrl.u32 %v257, 7
    %v259 = vsub.s32 %v256, %v258
    %v260 = vrot.slane %v247, %v259
    %vm261 = vcmask 130112
    %v262 = vsel %vm261, %v260, %v255
    %vm264 = vcmask 122880
    %265 = vst.msk [vmem:[#allocation3] sm:$0x1] %vm264, %v262
    // Predicated region
    $region30: #{tpu_custom_call.1} parent=1 // pred_check
      _
    $region31: #{tpu_custom_call.1} parent=1 // pred_check_branch
      %267 = sbr.rel (0) target = $region33
    $region32: #{tpu_custom_call.1} parent=1 // pred_region
      %s269 = ssub.s32 16, 16
      %270 = vsyncadd [#allocation4], %s269
      %s272 = sshll.u32 [#allocation3], 4
      %s273 = int_to_ptr.vmem [resolvable:$true] %s272
      %275 = dma.vmem_to_hbm [thread:$0]  %s273, 16, %s7, [#allocation4]
    $region33: #{tpu_custom_call.1} parent=1 // pred_fallthru
      _
    // Predicated region
    $region34: #{tpu_custom_call.1} parent=1 // pred_check
      _
    $region35: #{tpu_custom_call.1} parent=1 // pred_check_branch
      %277 = sbr.rel (0) target = $region37
    $region36: #{tpu_custom_call.1} parent=1 // pred_region
      %278 = dma.done [#allocation4], 16
    $region37: #{tpu_custom_call.1} parent=1 // pred_fallthru
      _
    %279 = vsyncpa [#allocation4], 1

</llo_original>
